<compile_context>
chip_gen: v6e
topology: v6e:2x2x1
jax: 0.10.0
libtpu: 0.0.40
codegen_flags: <defaults>
</compile_context>

<pallas_src>
import functools
import math

import jax
import jax.numpy as jnp
from jax.experimental import pallas as pl
from jax.experimental.pallas import tpu as pltpu


def _round_up(a, b):
    return (a + b - 1) // b * b


def _cdiv(a, b):
    return (a + b - 1) // b


# --------------------------------------------------------------------------- #
# Pass 1: dense -> GELU -> LayerNorm                                           #
# --------------------------------------------------------------------------- #
def _dense_gelu_ln_kernel(x_ref, w1_ref, b1_ref, g_ref, beta_ref, h_ref, *,
                          eps, compute_dtype):
    # x tile arrives in its original dtype; cast in-kernel (no extra HBM copy).
    x = x_ref[...].astype(compute_dtype)
    h = jnp.dot(x, w1_ref[...], preferred_element_type=jnp.float32)
    h = h + b1_ref[...]                                   # bias in f32
    # exact (erf) GELU, matching torch.nn.functional.gelu default -- f32 math.
    h = 0.5 * h * (1.0 + jax.lax.erf(h * (1.0 / math.sqrt(2.0))))
    # LayerNorm over hidden dim; single-pass statistics: var = E[h^2] - mean^2.
    mean = jnp.mean(h, axis=-1, keepdims=True)
    mean_sq = jnp.mean(h * h, axis=-1, keepdims=True)
    var = jnp.maximum(mean_sq - mean * mean, 0.0)
    h = (h - mean) * jax.lax.rsqrt(var + eps)
    h = h * g_ref[...] + beta_ref[...]
    h_ref[...] = h.astype(h_ref.dtype)                    # store in compute dtype


# --------------------------------------------------------------------------- #
# Pass 2: decoder matmul (W2 tile resident across the inner row axis)          #
# --------------------------------------------------------------------------- #
def _decoder_kernel(h_ref, w2_ref, b2_ref, o_ref):
    logits = jnp.dot(h_ref[...], w2_ref[...], preferred_element_type=jnp.float32)
    o_ref[...] = (logits + b2_ref[...]).astype(o_ref.dtype)


# --------------------------------------------------------------------------- #
# Tile / VMEM heuristics                                                       #
# --------------------------------------------------------------------------- #
def _pick_row_tiles(M, granule, tm2_max, tm1_max):
    """Pick (tm1, tm2, Mp): pass-1 tile, pass-2 tile, padded row count.

    Keeps padding waste below one pass-2 tile and makes tm1 a multiple of tm2
    that divides Mp exactly.
    """
    n2 = max(1, _cdiv(M, tm2_max))
    tm2 = _round_up(_cdiv(M, n2), granule)
    Mp = _round_up(M, tm2)
    n_rows = Mp // tm2
    k = max(1, min(max(1, tm1_max // tm2), n_rows))
    while n_rows % k:
        k -= 1
    tm1 = k * tm2
    return tm1, tm2, Mp


def _vmem_limit(working_set_bytes):
    # ~2x the computed per-call working set, clamped to [32 MiB, 48 MiB]:
    # leaves headroom on v7x's 64 MiB physical VMEM, plenty on v5e/v6e.
    return int(min(48 * 1024 * 1024, max(32 * 1024 * 1024, 2 * working_set_bytes)))


# --------------------------------------------------------------------------- #
# Parameter preparation (do this ONCE, outside the per-call hot path)          #
# --------------------------------------------------------------------------- #
def prepare_params(params, *, compute_dtype=jnp.bfloat16, tv_max=4096):
    """Pre-cast weights to the compute dtype and pre-pad the vocab axis."""
    H = params["dense_w"].shape[0]
    V = params["dec_w"].shape[1]
    tv = min(tv_max, _round_up(V, 128))
    Vp = _round_up(V, tv)

    w2 = params["dec_w"].astype(compute_dtype)
    b2 = params["dec_b"].astype(jnp.float32).reshape(1, V)
    if Vp != V:
        w2 = jnp.pad(w2, ((0, 0), (0, Vp - V)))
        b2 = jnp.pad(b2, ((0, 0), (0, Vp - V)))

    return {
        "w1": params["dense_w"].astype(compute_dtype),
        "b1": params["dense_b"].astype(jnp.float32).reshape(1, H),
        "g": params["ln_g"].astype(jnp.float32).reshape(1, H),
        "beta": params["ln_b"].astype(jnp.float32).reshape(1, H),
        "w2": w2,
        "b2": b2,
        # static metadata (Python ints) -- keep the wrapper un-jitted or treat
        # these as static when jitting.
        "vocab_size": V,
        "tv": tv,
    }


# --------------------------------------------------------------------------- #
# Forward pass                                                                 #
# --------------------------------------------------------------------------- #
def bert_prediction_prepared(hidden_states, prep, *, eps=1e-5, logits_dtype=None,
                             tm1_max=1024, tm2_max=512):
    """hidden_states: [B, S, H] -> logits [B, S, V] (uses prepare_params output).

    NOTE: eps=1e-5 matches torch.nn.LayerNorm's default (the reference module);
    HuggingFace BERT configs use layer_norm_eps=1e-12 -- pass eps=1e-12 there.
    """
    B, S, H = hidden_states.shape
    V = prep["vocab_size"]
    tv = prep["tv"]
    Vp = prep["w2"].shape[1]
    compute_dtype = prep["w1"].dtype
    M = B * S
    out_dtype = logits_dtype if logits_dtype is not None else hidden_states.dtype

    # Row-tile granularity: 16 for 16-bit compute dtypes (sublane packing), 8 for f32.
    granule = 8 * max(1, 4 // jnp.dtype(compute_dtype).itemsize)
    tm1, tm2, Mp = _pick_row_tiles(M, granule, tm2_max, tm1_max)

    x2d = hidden_states.reshape(M, H)
    if Mp != M:
        x2d = jnp.pad(x2d, ((0, Mp - M), (0, 0)))

    xbytes = jnp.dtype(x2d.dtype).itemsize
    cbytes = jnp.dtype(compute_dtype).itemsize
    obytes = jnp.dtype(out_dtype).itemsize

    # ---- pass 1: h = LN(GELU(x @ W1 + b1)), [Mp, H] in compute dtype -------- #
    ws1 = (2 * tm1 * H * xbytes          # x tile (double-buffered)
           + H * H * cbytes              # W1 resident
           + 3 * H * 4                   # b1 / gamma / beta
           + 2 * tm1 * H * cbytes)       # h out tile (double-buffered)
    h = pl.pallas_call(
        functools.partial(_dense_gelu_ln_kernel, eps=eps,
                          compute_dtype=compute_dtype),
        out_shape=jax.ShapeDtypeStruct((Mp, H), compute_dtype),
        grid_spec=pltpu.PrefetchScalarGridSpec(
            num_scalar_prefetch=0,
            grid=(Mp // tm1,),
            in_specs=[
                pl.BlockSpec((tm1, H), lambda i: (i, 0)),   # x tile (orig dtype)
                pl.BlockSpec((H, H), lambda i: (0, 0)),     # W1 (resident)
                pl.BlockSpec((1, H), lambda i: (0, 0)),     # b1
                pl.BlockSpec((1, H), lambda i: (0, 0)),     # gamma
                pl.BlockSpec((1, H), lambda i: (0, 0)),     # beta
            ],
            out_specs=pl.BlockSpec((tm1, H), lambda i: (i, 0)),
        ),
        compiler_params=pltpu.CompilerParams(
            dimension_semantics=("parallel",),
            vmem_limit_bytes=_vmem_limit(ws1)),
        cost_estimate=pl.CostEstimate(
            flops=2 * Mp * H * H,
            transcendentals=Mp * H,
            bytes_accessed=Mp * H * (xbytes + cbytes) + H * H * cbytes),
    )(x2d, prep["w1"], prep["b1"], prep["g"], prep["beta"])

    # ---- pass 2: logits = h @ W2 + b2 --------------------------------------- #
    # Grid: vocab tiles OUTER, row tiles INNER -> the (H, tv) W2 tile's block
    # index is constant across the inner axis, so W2 is streamed from HBM ~once.
    # Inner axis marked "arbitrary" so v7x megacore shards only the vocab axis
    # (each W2 tile fetched by exactly one core); neutral on v5e/v6e.
    ws2 = 2 * (tm2 * H * cbytes          # h tile
               + H * tv * cbytes         # W2 tile
               + tv * 4                  # b2 tile
               + tm2 * tv * obytes)      # output tile
    out2d = pl.pallas_call(
        _decoder_kernel,
        out_shape=jax.ShapeDtypeStruct((Mp, Vp), out_dtype),
        grid_spec=pltpu.PrefetchScalarGridSpec(
            num_scalar_prefetch=0,
            grid=(Vp // tv, Mp // tm2),
            in_specs=[
                pl.BlockSpec((tm2, H), lambda j, i: (i, 0)),   # h tile (streams)
                pl.BlockSpec((H, tv), lambda j, i: (0, j)),    # W2 tile (resident)
                pl.BlockSpec((1, tv), lambda j, i: (0, j)),    # b2 tile
            ],
            out_specs=pl.BlockSpec((tm2, tv), lambda j, i: (i, j)),
        ),
        compiler_params=pltpu.CompilerParams(
            dimension_semantics=("parallel", "arbitrary"),
            vmem_limit_bytes=_vmem_limit(ws2)),
        cost_estimate=pl.CostEstimate(
            flops=2 * Mp * H * Vp,
            transcendentals=0,
            bytes_accessed=(Vp // tv) * Mp * H * cbytes
            + H * Vp * cbytes + Mp * Vp * obytes),
    )(h, prep["w2"], prep["b2"])

    logits = out2d
    if Mp != M or Vp != V:
        logits = logits[:M, :V]
    return logits.reshape(B, S, V)


def bert_prediction(hidden_states, params, *, compute_dtype=jnp.bfloat16,
                    eps=1e-5, logits_dtype=None, tv_max=4096):
    """Convenience wrapper: prepares params then runs the two-pass kernels.
    For repeated calls, call prepare_params() once and use
    bert_prediction_prepared() to keep weight cast/pad out of the hot path."""
    prep = prepare_params(params, compute_dtype=compute_dtype, tv_max=tv_max)
    return bert_prediction_prepared(hidden_states, prep, eps=eps,
                                    logits_dtype=logits_dtype)


# --------------------------------------------------------------------------- #
# Params / reference                                                           #
# --------------------------------------------------------------------------- #
def init_params(key, hidden_size, vocab_size, dtype=jnp.float32):
    k1, k2, k3, k4, k5, k6 = jax.random.split(key, 6)
    scale_h = 1.0 / math.sqrt(hidden_size)
    return {
        "dense_w": jax.random.normal(k1, (hidden_size, hidden_size), dtype) * scale_h,
        "dense_b": jax.random.normal(k2, (hidden_size,), dtype) * 0.02,
        "ln_g": 1.0 + 0.02 * jax.random.normal(k3, (hidden_size,), dtype),
        "ln_b": 0.02 * jax.random.normal(k4, (hidden_size,), dtype),
        "dec_w": jax.random.normal(k5, (hidden_size, vocab_size), dtype) * scale_h,
        "dec_b": jax.random.normal(k6, (vocab_size,), dtype) * 0.02,
    }


def _reference(hidden_states, params, eps=1e-5):
    h = hidden_states @ params["dense_w"] + params["dense_b"]
    h = jax.nn.gelu(h, approximate=False)
    mean = jnp.mean(h, axis=-1, keepdims=True)
    var = jnp.mean(jnp.square(h - mean), axis=-1, keepdims=True)
    h = (h - mean) * jax.lax.rsqrt(var + eps)
    h = h * params["ln_g"] + params["ln_b"]
    return h @ params["dec_w"] + params["dec_b"]


if __name__ == "__main__":
    B, S, H, V = 2, 8, 32, 256
    key = jax.random.PRNGKey(0)
    kx, kp = jax.random.split(key)
    hidden_states = jax.random.normal(kx, (B, S, H), jnp.float32)
    params = init_params(kp, H, V)

    ref = _reference(hidden_states, params)

    # f32 compute path: close to reference.
    out_f32 = bert_prediction(hidden_states, params, compute_dtype=jnp.float32)
    jax.block_until_ready(out_f32)
    assert out_f32.shape == (B, S, V)
    assert jnp.allclose(out_f32, ref, atol=1e-4, rtol=1e-4)

    # Production path: prepare weights once (bf16, vocab pre-padded), then run
    # the hot-path call; looser tolerance for bf16 operands.
    prep = prepare_params(params, compute_dtype=jnp.bfloat16)
    out_bf16 = bert_prediction_prepared(hidden_states, prep)
    jax.block_until_ready(out_bf16)
    assert out_bf16.shape == (B, S, V)
    assert jnp.allclose(out_bf16, ref, atol=5e-2, rtol=5e-2)

    print("KERNEL_OK")
</pallas_src>

<mosaic_0001>
module attributes {stable_mosaic.version = 11 : i64} {
  func.func @_dense_gelu_ln_kernel(%arg0: i32, %arg1: memref<16x32xf32, #tpu.memory_space<vmem>>, %arg2: memref<32x32xf32, #tpu.memory_space<vmem>>, %arg3: memref<1x32xf32, #tpu.memory_space<vmem>>, %arg4: memref<1x32xf32, #tpu.memory_space<vmem>>, %arg5: memref<1x32xf32, #tpu.memory_space<vmem>>, %arg6: memref<16x32xf32, #tpu.memory_space<vmem>>) attributes {dimension_semantics = [#tpu.dimension_semantics<parallel>], iteration_bounds = array<i64: 1>, scalar_prefetch = 0 : i64, scratch_operands = 0 : i64, tpu.core_type = #tpu.core_type<tc>, window_params = [{transform_indices = @transform_0, window_bounds = array<i64: 16, 32>}, {pipeline_mode = #tpu.pipeline_mode<synchronous>, transform_indices = @transform_1, window_bounds = array<i64: 32, 32>}, {pipeline_mode = #tpu.pipeline_mode<synchronous>, transform_indices = @transform_2, window_bounds = array<i64: 1, 32>}, {pipeline_mode = #tpu.pipeline_mode<synchronous>, transform_indices = @transform_3, window_bounds = array<i64: 1, 32>}, {pipeline_mode = #tpu.pipeline_mode<synchronous>, transform_indices = @transform_4, window_bounds = array<i64: 1, 32>}, {transform_indices = @transform_5, window_bounds = array<i64: 16, 32>}]} {
    %c0 = arith.constant 0 : index
    %c0_0 = arith.constant 0 : index
    %0 = vector.load %arg1[%c0, %c0_0] : memref<16x32xf32, #tpu.memory_space<vmem>>, vector<16x32xf32>
    %c0_1 = arith.constant 0 : index
    %c0_2 = arith.constant 0 : index
    %1 = vector.load %arg2[%c0_1, %c0_2] : memref<32x32xf32, #tpu.memory_space<vmem>>, vector<32x32xf32>
    %cst = arith.constant dense<0.000000e+00> : vector<16x32xf32>
    %2 = tpu.matmul %0, %1, %cst {dimension_numbers = #tpu.dot_dimension_numbers<[1], [0], [0], [1], [0, 0, 1, 1], [], []>} : vector<16x32xf32>, vector<32x32xf32>, vector<16x32xf32> -> vector<16x32xf32>
    %c0_3 = arith.constant 0 : index
    %c0_4 = arith.constant 0 : index
    %3 = vector.load %arg3[%c0_3, %c0_4] : memref<1x32xf32, #tpu.memory_space<vmem>>, vector<1x32xf32>
    %4 = vector.broadcast %3 : vector<1x32xf32> to vector<16x32xf32>
    %5 = arith.addf %2, %4 : vector<16x32xf32>
    %cst_5 = arith.constant 5.000000e-01 : f32
    %6 = vector.broadcast %cst_5 : f32 to vector<16x32xf32>
    %7 = arith.mulf %6, %5 : vector<16x32xf32>
    %cst_6 = arith.constant 0.707106769 : f32
    %8 = vector.broadcast %cst_6 : f32 to vector<16x32xf32>
    %9 = arith.mulf %5, %8 : vector<16x32xf32>
    %10 = math.erf %9 : vector<16x32xf32>
    %cst_7 = arith.constant 1.000000e+00 : f32
    %11 = vector.broadcast %cst_7 : f32 to vector<16x32xf32>
    %12 = arith.addf %11, %10 : vector<16x32xf32>
    %13 = arith.mulf %7, %12 : vector<16x32xf32>
    %cst_8 = arith.constant dense<0.000000e+00> : vector<16xf32>
    %14 = vector.multi_reduction <add>, %13, %cst_8 [1] : vector<16x32xf32> to vector<16xf32>
    %15 = vector.shape_cast %14 : vector<16xf32> to vector<16x1xf32>
    %cst_9 = arith.constant 3.200000e+01 : f32
    %16 = vector.broadcast %cst_9 : f32 to vector<16x1xf32>
    %17 = arith.divf %15, %16 : vector<16x1xf32>
    %18 = arith.mulf %13, %13 : vector<16x32xf32>
    %cst_10 = arith.constant dense<0.000000e+00> : vector<16xf32>
    %19 = vector.multi_reduction <add>, %18, %cst_10 [1] : vector<16x32xf32> to vector<16xf32>
    %20 = vector.shape_cast %19 : vector<16xf32> to vector<16x1xf32>
    %cst_11 = arith.constant 3.200000e+01 : f32
    %21 = vector.broadcast %cst_11 : f32 to vector<16x1xf32>
    %22 = arith.divf %20, %21 : vector<16x1xf32>
    %23 = arith.mulf %17, %17 : vector<16x1xf32>
    %24 = arith.subf %22, %23 : vector<16x1xf32>
    %cst_12 = arith.constant 0.000000e+00 : f32
    %25 = vector.broadcast %cst_12 : f32 to vector<16x1xf32>
    %26 = arith.maximumf %24, %25 : vector<16x1xf32>
    %27 = vector.broadcast %17 : vector<16x1xf32> to vector<16x32xf32>
    %28 = arith.subf %13, %27 : vector<16x32xf32>
    %cst_13 = arith.constant 9.99999974E-6 : f32
    %29 = vector.broadcast %cst_13 : f32 to vector<16x1xf32>
    %30 = arith.addf %26, %29 : vector<16x1xf32>
    %31 = math.rsqrt %30 : vector<16x1xf32>
    %32 = vector.broadcast %31 : vector<16x1xf32> to vector<16x32xf32>
    %33 = arith.mulf %28, %32 : vector<16x32xf32>
    %c0_14 = arith.constant 0 : index
    %c0_15 = arith.constant 0 : index
    %34 = vector.load %arg4[%c0_14, %c0_15] : memref<1x32xf32, #tpu.memory_space<vmem>>, vector<1x32xf32>
    %35 = vector.broadcast %34 : vector<1x32xf32> to vector<16x32xf32>
    %36 = arith.mulf %33, %35 : vector<16x32xf32>
    %c0_16 = arith.constant 0 : index
    %c0_17 = arith.constant 0 : index
    %37 = vector.load %arg5[%c0_16, %c0_17] : memref<1x32xf32, #tpu.memory_space<vmem>>, vector<1x32xf32>
    %38 = vector.broadcast %37 : vector<1x32xf32> to vector<16x32xf32>
    %39 = arith.addf %36, %38 : vector<16x32xf32>
    %c0_18 = arith.constant 0 : index
    %c0_19 = arith.constant 0 : index
    %40 = vector.load %arg6[%c0_18, %c0_19] : memref<16x32xf32, #tpu.memory_space<vmem>>, vector<16x32xf32>
    tpu.vector_store %arg6[%c0_18, %c0_19], %39 {strides = array<i32>} : memref<16x32xf32, #tpu.memory_space<vmem>>, vector<16x32xf32>,
    return
  }
  func.func @transform_0(%arg0: i32) -> (i32, i32) {
    %c0_i32 = arith.constant 0 : i32
    %c0_i32_0 = arith.constant 0 : i32
    return %arg0, %c0_i32 : i32, i32
  }
  func.func @transform_1(%arg0: i32) -> (i32, i32) {
    %c0_i32 = arith.constant 0 : i32
    %c0_i32_0 = arith.constant 0 : i32
    %c0_i32_1 = arith.constant 0 : i32
    return %c0_i32, %c0_i32_0 : i32, i32
  }
  func.func @transform_2(%arg0: i32) -> (i32, i32) {
    %c0_i32 = arith.constant 0 : i32
    %c0_i32_0 = arith.constant 0 : i32
    %c0_i32_1 = arith.constant 0 : i32
    return %c0_i32, %c0_i32_0 : i32, i32
  }
  func.func @transform_3(%arg0: i32) -> (i32, i32) {
    %c0_i32 = arith.constant 0 : i32
    %c0_i32_0 = arith.constant 0 : i32
    %c0_i32_1 = arith.constant 0 : i32
    return %c0_i32, %c0_i32_0 : i32, i32
  }
  func.func @transform_4(%arg0: i32) -> (i32, i32) {
    %c0_i32 = arith.constant 0 : i32
    %c0_i32_0 = arith.constant 0 : i32
    %c0_i32_1 = arith.constant 0 : i32
    return %c0_i32, %c0_i32_0 : i32, i32
  }
  func.func @transform_5(%arg0: i32) -> (i32, i32) {
    %c0_i32 = arith.constant 0 : i32
    %c0_i32_0 = arith.constant 0 : i32
    return %arg0, %c0_i32 : i32, i32
  }
}

</mosaic_0001>

<llo_original>
// kernel: tpu_custom_call.1
$region0: #{tpu_custom_call.1}
  #allocation0 [shape = 'u32[]', space=smem, size = 0x4, offset = 0x4, fixed_abs, tag = 'smem constant byte address 0x4 - core index']
  #allocation1 [shape = 'u32[144,128]{1,0:T(1,128)}', space=vmem, size = 0x12000, scoped, tag = 'internal scratch']
  %s0 = inlined_call_operand.hbm [shape: f32[16,32], index: 0, kind: input, shape index: {}]
  %s1 = inlined_call_operand.hbm [shape: f32[32,32], index: 1, kind: input, shape index: {}]
  %s2 = inlined_call_operand.vmem [shape: f32[1,32], index: 2, kind: input, shape index: {}]
  %s3 = inlined_call_operand.vmem [shape: f32[1,32], index: 3, kind: input, shape index: {}]
  %s4 = inlined_call_operand.vmem [shape: f32[1,32], index: 4, kind: input, shape index: {}]
  %s5 = inlined_call_operand.hbm [shape: f32[16,32], index: 5, kind: output, shape index: {}]
  %s6 = sld [smem:[#allocation0]]
  $region38: #{tpu_custom_call.1} parent=0
    _
  %s8 = ssub.s32 1, %s6
  %s9 = scalar_select 0, %s8, %s6
  $region1: #{tpu_custom_call.1} parent=0
    #allocation2 [shape = 'u8[8192]{0}', space=vmem, size = 0x2000, scoped, tag = 'input window, operand 0, single buffered']
    #allocation3 [shape = 's32[1]{0}', space=sflag, size = 0x4, scoped, tag = 'scoped memory for tpu_custom_call.1']
    #allocation4 [shape = 's32[1]{0}', space=sflag, size = 0x4, scoped, tag = 'scoped memory for tpu_custom_call.1']
    #allocation5 [shape = 'u8[16384]{0}', space=vmem, size = 0x4000, scoped, tag = 'input window, operand 1, single buffered']
    #allocation6 [shape = 's32[1]{0}', space=sflag, size = 0x4, scoped, tag = 'scoped memory for tpu_custom_call.1']
    #allocation7 [shape = 'u8[8192]{0}', space=vmem, size = 0x2000, scoped, tag = 'output window, operand 0, single buffered']
    %10 = vsyncpa [#allocation3], 0
    %11 = vsyncpa [#allocation6], 0
    %12 = vsyncpa [#allocation4], 0
    // Predicated region
    $region2: #{tpu_custom_call.1} parent=1 // pred_check
      _
    $region3: #{tpu_custom_call.1} parent=1 // pred_check_branch
      %14 = sbr.rel (0) target = $region5
    $region4: #{tpu_custom_call.1} parent=1 // pred_region
      %s16 = ssub.s32 256, 256
      %17 = vsyncadd [#allocation3], %s16
      %s18 = sshll.u32 [#allocation2], 4
      %s19 = int_to_ptr.vmem [resolvable:$true] %s18
      %24 = dma.hbm_to_vmem [thread:$0]  %s0, 256, %s19, [#allocation3], 128, 128, 8
    $region5: #{tpu_custom_call.1} parent=1 // pred_fallthru
      _
    // Predicated region
    $region6: #{tpu_custom_call.1} parent=1 // pred_check
      _
    $region7: #{tpu_custom_call.1} parent=1 // pred_check_branch
      %26 = sbr.rel (0) target = $region9
    $region8: #{tpu_custom_call.1} parent=1 // pred_region
      %s28 = ssub.s32 512, 512
      %29 = vsyncadd [#allocation6], %s28
      %s30 = sshll.u32 [#allocation5], 4
      %s31 = int_to_ptr.vmem [resolvable:$true] %s30
      %36 = dma.hbm_to_vmem [thread:$0]  %s1, 512, %s31, [#allocation6], 128, 128, 8
    $region9: #{tpu_custom_call.1} parent=1 // pred_fallthru
      _
    // Predicated region
    $region10: #{tpu_custom_call.1} parent=1 // pred_check
      _
    $region11: #{tpu_custom_call.1} parent=1 // pred_check_branch
      %38 = sbr.rel (0) target = $region13
    $region12: #{tpu_custom_call.1} parent=1 // pred_region
      _
    $region13: #{tpu_custom_call.1} parent=1 // pred_fallthru
      _
    // Predicated region
    $region14: #{tpu_custom_call.1} parent=1 // pred_check
      _
    $region15: #{tpu_custom_call.1} parent=1 // pred_check_branch
      %40 = sbr.rel (0) target = $region17
    $region16: #{tpu_custom_call.1} parent=1 // pred_region
      _
    $region17: #{tpu_custom_call.1} parent=1 // pred_fallthru
      _
    // Predicated region
    $region18: #{tpu_custom_call.1} parent=1 // pred_check
      _
    $region19: #{tpu_custom_call.1} parent=1 // pred_check_branch
      %42 = sbr.rel (0) target = $region21
    $region20: #{tpu_custom_call.1} parent=1 // pred_region
      _
    $region21: #{tpu_custom_call.1} parent=1 // pred_fallthru
      _
    // Predicated region
    $region22: #{tpu_custom_call.1} parent=1 // pred_check
      _
    $region23: #{tpu_custom_call.1} parent=1 // pred_check_branch
      %44 = sbr.rel (0) target = $region25
    $region24: #{tpu_custom_call.1} parent=1 // pred_region
      %45 = dma.done [#allocation3], 256
    $region25: #{tpu_custom_call.1} parent=1 // pred_fallthru
      _
    // Predicated region
    $region26: #{tpu_custom_call.1} parent=1 // pred_check
      _
    $region27: #{tpu_custom_call.1} parent=1 // pred_check_branch
      %47 = sbr.rel (0) target = $region29
    $region28: #{tpu_custom_call.1} parent=1 // pred_region
      %48 = dma.done [#allocation6], 512
    $region29: #{tpu_custom_call.1} parent=1 // pred_fallthru
      _
    %v49 = vld [vmem:[#allocation2] sm:$0xff]
    %v50 = vld [vmem:[#allocation2 + $0x8] sm:$0xff]
    %v51 = vld [vmem:[#allocation5] sm:$0xff]
    %v52 = vld [vmem:[#allocation5 + $0x8] sm:$0xff]
    %v53 = vld [vmem:[#allocation5 + $0x10] sm:$0xff]
    %v54 = vld [vmem:[#allocation5 + $0x18] sm:$0xff]
    %v55 = vld [vmem:[%s2] sm:$0x1]
    %v57 = vlaneseq
    %v58 = vshrl.u32 %v57, 7
    %v59 = vsub.s32 0, %v58
    %v60 = vrot.slane %v55, %v59
    %vm62 = vcmask 261120
    %v64 = vsel %vm62, %v49, 0
    %v67 = vsel %vm62, %v50, 0
    %69 = vmatprep.subr.mxu0 0.0
    %70 = vmatpush1.msra.mxu0 0.0
    %71 = vmatprep.subr.mxu0 0.0
    %72 = vmatpush1.msra.mxu0 0.0
    %73 = vmatprep.subr.mxu0 0.0
    %74 = vmatpush1.msra.mxu0 0.0
    %75 = vmatprep.subr.mxu0 0.0
    %76 = vmatpush1.msra.mxu0 0.0
    %77 = vmatprep.subr.mxu0 0.0
    %78 = vmatpush1.msra.mxu0 0.0
    %79 = vmatprep.subr.mxu0 0.0
    %80 = vmatpush1.msra.mxu0 0.0
    %81 = vmatprep.subr.mxu0 0.0
    %82 = vmatpush1.msra.mxu0 0.0
    %83 = vmatprep.subr.mxu0 0.0
    %84 = vmatpush1.msra.mxu0 0.0
    %85 = vmatprep.subr.mxu0 0.0
    %86 = vmatpush1.msra.mxu0 0.0
    %87 = vmatprep.subr.mxu0 0.0
    %88 = vmatpush1.msra.mxu0 0.0
    %89 = vmatprep.subr.mxu0 0.0
    %90 = vmatpush1.msra.mxu0 0.0
    %91 = vmatprep.subr.mxu0 0.0
    %92 = vmatpush1.msra.mxu0 0.0
    %93 = vmatprep.subr.mxu0 0.0
    %94 = vmatpush1.msra.mxu0 %v54
    %95 = vmatprep.subr.mxu0 0.0
    %96 = vmatpush1.msra.mxu0 %v53
    %97 = vmatprep.subr.mxu0 0.0
    %98 = vmatpush1.msra.mxu0 %v52
    %99 = vmatprep.subr.mxu0 0.0
    %100 = vmatpush1.msra.mxu0 %v51
    %101 = vmatprep.subr.mxu0 0.0
    %102 = vmatpush2.msra.mxu0 0.0
    %103 = vmatprep.subr.mxu0 0.0
    %104 = vmatpush2.msra.mxu0 0.0
    %105 = vmatprep.subr.mxu0 0.0
    %106 = vmatpush2.msra.mxu0 0.0
    %107 = vmatprep.subr.mxu0 0.0
    %108 = vmatpush2.msra.mxu0 0.0
    %109 = vmatprep.subr.mxu0 0.0
    %110 = vmatpush2.msra.mxu0 0.0
    %111 = vmatprep.subr.mxu0 0.0
    %112 = vmatpush2.msra.mxu0 0.0
    %113 = vmatprep.subr.mxu0 0.0
    %114 = vmatpush2.msra.mxu0 0.0
    %115 = vmatprep.subr.mxu0 0.0
    %116 = vmatpush2.msra.mxu0 0.0
    %117 = vmatprep.subr.mxu0 0.0
    %118 = vmatpush2.msra.mxu0 0.0
    %119 = vmatprep.subr.mxu0 0.0
    %120 = vmatpush2.msra.mxu0 0.0
    %121 = vmatprep.subr.mxu0 0.0
    %122 = vmatpush2.msra.mxu0 0.0
    %123 = vmatprep.subr.mxu0 0.0
    %124 = vmatpush2.msra.mxu0 0.0
    %125 = vmatprep.subr.mxu0 0.0
    %126 = vmatpush2.msra.mxu0 0.0
    %127 = vmatprep.subr.mxu0 0.0
    %128 = vmatpush2.msra.mxu0 0.0
    %129 = vmatprep.subr.mxu0 0.0
    %130 = vmatpush2.msra.mxu0 0.0
    %131 = vmatprep.subr.mxu0 0.0
    %132 = vmatpush2.msra.mxu0 0.0
    %133 = vmatprep.mubr.f32.mxu0 0.0
    %134 = vmatmul.mubr.f32.gmra.mxu0 %v64
    %v135 = vpop.f32.mrf.mxu0
    %v136 = vadd.f32 %v60, %v135
    %v137 = vpop.f32.mrf.mxu0
    %138 = vmatprep.mubr.f32.mxu0 0.0
    %139 = vmatmul.mubr.f32.gmra.mxu0 %v67
    %v140 = vpop.f32.mrf.mxu0
    %v141 = vadd.f32 %v60, %v140
    %v142 = vpop.f32.mrf.mxu0
    %143 = vdwg.mxu0
    %v144 = vmul.f32 %v136, 0.5
    %v145 = vmul.f32 %v141, 0.5
    %v146 = vmul.f32 %v136, 0.70710677
    %v147 = vmul.f32 %v141, 0.70710677
    %v148 = verf.f32.pop %v146
    %v149 = verf.f32.pop %v147
    %v150 = vadd.f32 %v148, 1.0
    %v151 = vadd.f32 %v149, 1.0
    %v152 = vmul.f32 %v144, %v150
    %v153 = vmul.f32 %v145, %v151
    %v154 = vsel %vm62, %v152, 0.0
    %155 = vadd.xlane.f32.xlu0 %v154
    %v156 = vpop.xlane.xlu0 %155
    %v157 = vsel %vm62, %v153, 0.0
    %158 = vadd.xlane.f32.xlu0 %v157
    %v159 = vpop.xlane.xlu0 %158
    %v160 = vrcp.pop 32.0
    %v161 = vmul.f32 %v156, %v160
    %v162 = vmul.f32 %v159, %v160
    %v163 = vmul.f32 %v152, %v152
    %v164 = vmul.f32 %v153, %v153
    %v165 = vsel %vm62, %v163, 0.0
    %166 = vadd.xlane.f32.xlu0 %v165
    %v167 = vpop.xlane.xlu0 %166
    %v168 = vsel %vm62, %v164, 0.0
    %169 = vadd.xlane.f32.xlu0 %v168
    %v170 = vpop.xlane.xlu0 %169
    %v171 = vmul.f32 %v167, %v160
    %v172 = vmul.f32 %v170, %v160
    %v173 = vmul.f32 %v161, %v161
    %v174 = vmul.f32 %v162, %v162
    %v175 = vsub.f32 %v171, %v173
    %v176 = vsub.f32 %v172, %v174
    %v177 = vmax.f32 %v175, 0.0
    %v178 = vmax.f32 %v176, 0.0
    %v179 = vsub.f32 %v152, %v161
    %v180 = vsub.f32 %v153, %v162
    %v181 = vadd.f32 %v177, 1e-05
    %v182 = vadd.f32 %v178, 1e-05
    %v183 = vrsqrt.pop %v181
    %v184 = vrsqrt.pop %v182
    %v185 = vmul.f32 %v179, %v183
    %v186 = vmul.f32 %v180, %v184
    %v187 = vld [vmem:[%s3] sm:$0x1]
    %v189 = vlaneseq
    %v190 = vshrl.u32 %v189, 7
    %v191 = vsub.s32 0, %v190
    %v192 = vrot.slane %v187, %v191
    %v194 = vmul.f32 %v185, %v192
    %v195 = vmul.f32 %v186, %v192
    %v196 = vld [vmem:[%s4] sm:$0x1]
    %v198 = vlaneseq
    %v199 = vshrl.u32 %v198, 7
    %v200 = vsub.s32 0, %v199
    %v201 = vrot.slane %v196, %v200
    %v203 = vadd.f32 %v194, %v201
    %v204 = vadd.f32 %v195, %v201
    %205 = vst.msk [vmem:[#allocation7] sm:$0xff] %vm62, %v203
    %206 = vst.msk [vmem:[#allocation7 + $0x8] sm:$0xff] %vm62, %v204
    // Predicated region
    $region30: #{tpu_custom_call.1} parent=1 // pred_check
      _
    $region31: #{tpu_custom_call.1} parent=1 // pred_check_branch
      %208 = sbr.rel (0) target = $region33
    $region32: #{tpu_custom_call.1} parent=1 // pred_region
      %s210 = ssub.s32 256, 256
      %211 = vsyncadd [#allocation4], %s210
      %s212 = sshll.u32 [#allocation7], 4
      %s213 = int_to_ptr.vmem [resolvable:$true] %s212
      %218 = dma.vmem_to_hbm [thread:$0]  %s213, 256, %s5, [#allocation4], 128, 128, 8
    $region33: #{tpu_custom_call.1} parent=1 // pred_fallthru
      _
    // Predicated region
    $region34: #{tpu_custom_call.1} parent=1 // pred_check
      _
    $region35: #{tpu_custom_call.1} parent=1 // pred_check_branch
      %220 = sbr.rel (0) target = $region37
    $region36: #{tpu_custom_call.1} parent=1 // pred_region
      %221 = dma.done [#allocation4], 256
    $region37: #{tpu_custom_call.1} parent=1 // pred_fallthru
      _
    %222 = vsyncpa [#allocation3], 1
    %223 = vsyncpa [#allocation6], 1
    %224 = vsyncpa [#allocation4], 1

</llo_original>
